<compile_context>
chip_gen: v5e
topology: v5e:2x2
jax: 0.10.0
libtpu: 0.0.40
codegen_flags: <defaults>
</compile_context>

<pallas_src>
import jax
import jax.numpy as jnp
from jax.experimental import pallas as pl
from jax.experimental.pallas import tpu as pltpu

EPS = 1e-5
_LANE = 128
_TARGET_BLOCK_BYTES = 8 * 1024 * 1024   # aim for >= ~8 MiB of input per grid step
_SINGLE_PASS_STATS = True               # False -> two-pass (bit-closer to PyTorch)


def _vmem_budgets():
    """Return (tile_budget, vmem_limit) sized to this chip's physical VMEM."""
    cap = None
    try:
        cap = getattr(pltpu.get_tpu_info(), "vmem_capacity_bytes", None)
    except Exception:
        cap = None
    if cap is not None and cap >= 128 * 1024 * 1024:
        # v5e / v6e: 128 MiB physical VMEM (v5e default scoped limit is 16 MiB,
        # so the explicit override below is essential there).
        return 48 * 1024 * 1024, 96 * 1024 * 1024
    # v7x (64 MiB physical) or unknown: stay conservative.
    return 24 * 1024 * 1024, 48 * 1024 * 1024


def _make_layernorm_kernel(d):
    """Kernel body over a (row_tile, d) block; d is always the full hidden size."""
    inv_d = 1.0 / float(d)

    def kernel(x_ref, w_ref, b_ref, o_ref):
        # x_ref: (row_tile, d); w_ref/b_ref: (1, d) f32, VMEM-resident.
        x = x_ref[...].astype(jnp.float32)

        if _SINGLE_PASS_STATS:
            # one sweep over x; no centered temp held across a second reduction
            mean = jnp.sum(x, axis=-1, keepdims=True) * inv_d
            ex2 = jnp.sum(x * x, axis=-1, keepdims=True) * inv_d
            var = jnp.maximum(ex2 - mean * mean, 0.0)
            inv = jax.lax.rsqrt(var + EPS)
            # y = (x - mean) * inv * w + b  ==  x * s + t
            s = inv * w_ref[...]            # (rt,1)*(1,d) -> (rt,d)
            t = b_ref[...] - mean * s       # (1,d) - (rt,1)*(rt,d) -> (rt,d)
            o_ref[...] = (x * s + t).astype(o_ref.dtype)
        else:
            # two-pass variant (closer rounding order to F.layer_norm)
            mean = jnp.sum(x, axis=-1, keepdims=True) * inv_d
            xc = x - mean
            var = jnp.sum(xc * xc, axis=-1, keepdims=True) * inv_d
            inv = jax.lax.rsqrt(var + EPS)
            o_ref[...] = (xc * (inv * w_ref[...]) + b_ref[...]).astype(o_ref.dtype)

    return kernel


def _choose_row_tile(rows, d, in_dtype, out_dtype, tile_budget):
    """Row tile sized by a bytes-per-step target under the VMEM budget."""
    in_b = jnp.dtype(in_dtype).itemsize
    out_b = jnp.dtype(out_dtype).itemsize
    # sublane packing: 8 rows/vreg for 32-bit, 16 for bf16, 32 for int8
    pack = max(8, 32 // max(1, min(in_b, out_b)))
    # VMEM layout pads the lane dim to a multiple of 128 regardless of D
    d_lay = ((d + _LANE - 1) // _LANE) * _LANE
    # per-row footprint: double-buffered input + double-buffered output
    # + ~3 full-tile f32 temps (matches the kernel body above)
    per_row = d_lay * (2 * in_b + 2 * out_b + 3 * 4)
    rt_budget = max(pack, tile_budget // per_row)
    # bytes-per-step target: grow rt until ~8 MiB of input moves per grid step
    rt_target = max(pack, _TARGET_BLOCK_BYTES // (d_lay * in_b))
    rt = min(rt_budget, rt_target)
    rt = max(pack, (rt // pack) * pack)

    rows_rounded = ((rows + pack - 1) // pack) * pack
    if rt >= rows_rounded:
        if rows_rounded >= 2 * pack:
            # guarantee >= 2 grid steps so the "parallel" axis can shard across
            # both v7x TensorCores (and the pipeline has something to overlap)
            half = (rows_rounded + 1) // 2
            rt = ((half + pack - 1) // pack) * pack
        else:
            rt = rows_rounded
    return int(rt)


def layer_norm(x, weight, bias=None):
    """LayerNorm over the last dimension of x (any leading dims), eps=1e-5."""
    orig_shape = x.shape
    D = orig_shape[-1]
    rows = 1
    for s in orig_shape[:-1]:
        rows *= s
    x2 = x.reshape(rows, D)                        # metadata-only reshape

    if bias is None:
        bias = jnp.zeros((D,), dtype=jnp.float32)
    w2 = weight.astype(jnp.float32).reshape(1, D)  # pre-cast once in wrapper
    b2 = bias.astype(jnp.float32).reshape(1, D)

    tile_budget, vmem_limit = _vmem_budgets()
    rt = _choose_row_tile(rows, D, x2.dtype, x.dtype, tile_budget)
    grid = (pl.cdiv(rows, rt),)   # partial edge block: OOB writes are clipped

    in_b = jnp.dtype(x2.dtype).itemsize
    out_b = jnp.dtype(x.dtype).itemsize
    cost = pl.CostEstimate(
        flops=7 * rows * D,
        transcendentals=rows,
        bytes_accessed=rows * D * (in_b + out_b) + 2 * D * 4,
    )

    out = pl.pallas_call(
        _make_layernorm_kernel(D),
        out_shape=jax.ShapeDtypeStruct((rows, D), x.dtype),
        grid_spec=pltpu.PrefetchScalarGridSpec(
            num_scalar_prefetch=0,
            grid=grid,
            in_specs=[
                # last block dim == full D (legal even when D % 128 != 0),
                # so no wrapper-side pad and no in-kernel lane mask
                pl.BlockSpec((rt, D), lambda i: (i, 0)),
                pl.BlockSpec((1, D), lambda i: (0, 0)),   # resident weight
                pl.BlockSpec((1, D), lambda i: (0, 0)),   # resident bias
            ],
            out_specs=pl.BlockSpec((rt, D), lambda i: (i, 0)),
        ),
        compiler_params=pltpu.CompilerParams(
            dimension_semantics=("parallel",),    # shards rows across v7x TCs
            vmem_limit_bytes=vmem_limit,
        ),
        cost_estimate=cost,
    )(x2, w2, b2)

    return out.reshape(orig_shape)


def _reference(x, w, b):
    xf = x.astype(jnp.float32)
    mean = jnp.mean(xf, axis=-1, keepdims=True)
    var = jnp.mean((xf - mean) ** 2, axis=-1, keepdims=True)
    y = (xf - mean) * jax.lax.rsqrt(var + EPS)
    return (y * w + b).astype(x.dtype)


if __name__ == "__main__":
    key = jax.random.PRNGKey(0)
    k1, k2, k3, k4 = jax.random.split(key, 4)

    # Check 1: lane-dense hidden dim (D % 128 == 0) -- the fast path.
    B, T, D = 2, 8, 256
    x = jax.random.normal(k1, (B, T, D), dtype=jnp.float32)
    w = 1.0 + 0.1 * jax.random.normal(k2, (D,), dtype=jnp.float32)
    b = 0.1 * jax.random.normal(k3, (D,), dtype=jnp.float32)
    y = jax.block_until_ready(layer_norm(x, w, b))
    y_ref = _reference(x, w, b)
    assert jnp.max(jnp.abs(y - y_ref)) < 1e-4, "mismatch (lane-dense path)"

    # Check 2: non-lane-aligned hidden dim (unpadded full-D block) + partial
    # edge row block (rows % row_tile != 0). Params match the module's default
    # init (weight=ones, bias=zeros).
    B2, T2, D2 = 2, 7, 32
    xs = jax.random.normal(k4, (B2, T2, D2), dtype=jnp.float32)
    ws = jnp.ones((D2,), dtype=jnp.float32)
    bs = jnp.zeros((D2,), dtype=jnp.float32)
    ys = jax.block_until_ready(layer_norm(xs, ws, bs))
    ys_ref = _reference(xs, ws, bs)
    assert jnp.max(jnp.abs(ys - ys_ref)) < 1e-4, "mismatch (unpadded odd-D path)"

    print("KERNEL_OK")
</pallas_src>

<mosaic_0001>
module attributes {stable_mosaic.version = 11 : i64} {
  func.func @kernel(%arg0: i32, %arg1: memref<8x256xf32, #tpu.memory_space<vmem>>, %arg2: memref<1x256xf32, #tpu.memory_space<vmem>>, %arg3: memref<1x256xf32, #tpu.memory_space<vmem>>, %arg4: memref<8x256xf32, #tpu.memory_space<vmem>>) attributes {dimension_semantics = [#tpu.dimension_semantics<parallel>], iteration_bounds = array<i64: 2>, scalar_prefetch = 0 : i64, scratch_operands = 0 : i64, tpu.core_type = #tpu.core_type<tc>, window_params = [{transform_indices = @transform_0, window_bounds = array<i64: 8, 256>}, {pipeline_mode = #tpu.pipeline_mode<synchronous>, transform_indices = @transform_1, window_bounds = array<i64: 1, 256>}, {pipeline_mode = #tpu.pipeline_mode<synchronous>, transform_indices = @transform_2, window_bounds = array<i64: 1, 256>}, {transform_indices = @transform_3, window_bounds = array<i64: 8, 256>}]} {
    %c0 = arith.constant 0 : index
    %c0_0 = arith.constant 0 : index
    %0 = vector.load %arg1[%c0, %c0_0] : memref<8x256xf32, #tpu.memory_space<vmem>>, vector<8x256xf32>
    %cst = arith.constant dense<0.000000e+00> : vector<8xf32>
    %1 = vector.multi_reduction <add>, %0, %cst [1] : vector<8x256xf32> to vector<8xf32>
    %2 = vector.shape_cast %1 : vector<8xf32> to vector<8x1xf32>
    %cst_1 = arith.constant 3.906250e-03 : f32
    %3 = vector.broadcast %cst_1 : f32 to vector<8x1xf32>
    %4 = arith.mulf %2, %3 : vector<8x1xf32>
    %5 = arith.mulf %0, %0 : vector<8x256xf32>
    %cst_2 = arith.constant dense<0.000000e+00> : vector<8xf32>
    %6 = vector.multi_reduction <add>, %5, %cst_2 [1] : vector<8x256xf32> to vector<8xf32>
    %7 = vector.shape_cast %6 : vector<8xf32> to vector<8x1xf32>
    %cst_3 = arith.constant 3.906250e-03 : f32
    %8 = vector.broadcast %cst_3 : f32 to vector<8x1xf32>
    %9 = arith.mulf %7, %8 : vector<8x1xf32>
    %10 = arith.mulf %4, %4 : vector<8x1xf32>
    %11 = arith.subf %9, %10 : vector<8x1xf32>
    %cst_4 = arith.constant 0.000000e+00 : f32
    %12 = vector.broadcast %cst_4 : f32 to vector<8x1xf32>
    %13 = arith.maximumf %11, %12 : vector<8x1xf32>
    %cst_5 = arith.constant 9.99999974E-6 : f32
    %14 = vector.broadcast %cst_5 : f32 to vector<8x1xf32>
    %15 = arith.addf %13, %14 : vector<8x1xf32>
    %16 = math.rsqrt %15 : vector<8x1xf32>
    %c0_6 = arith.constant 0 : index
    %c0_7 = arith.constant 0 : index
    %17 = vector.load %arg2[%c0_6, %c0_7] : memref<1x256xf32, #tpu.memory_space<vmem>>, vector<1x256xf32>
    %18 = vector.broadcast %16 : vector<8x1xf32> to vector<8x256xf32>
    %19 = vector.broadcast %17 : vector<1x256xf32> to vector<8x256xf32>
    %20 = arith.mulf %18, %19 : vector<8x256xf32>
    %c0_8 = arith.constant 0 : index
    %c0_9 = arith.constant 0 : index
    %21 = vector.load %arg3[%c0_8, %c0_9] : memref<1x256xf32, #tpu.memory_space<vmem>>, vector<1x256xf32>
    %22 = vector.broadcast %4 : vector<8x1xf32> to vector<8x256xf32>
    %23 = arith.mulf %22, %20 : vector<8x256xf32>
    %24 = vector.broadcast %21 : vector<1x256xf32> to vector<8x256xf32>
    %25 = arith.subf %24, %23 : vector<8x256xf32>
    %26 = arith.mulf %0, %20 : vector<8x256xf32>
    %27 = arith.addf %26, %25 : vector<8x256xf32>
    %c0_10 = arith.constant 0 : index
    %c0_11 = arith.constant 0 : index
    %28 = vector.load %arg4[%c0_10, %c0_11] : memref<8x256xf32, #tpu.memory_space<vmem>>, vector<8x256xf32>
    tpu.vector_store %arg4[%c0_10, %c0_11], %27 {strides = array<i32>} : memref<8x256xf32, #tpu.memory_space<vmem>>, vector<8x256xf32>,
    return
  }
  func.func @transform_0(%arg0: i32) -> (i32, i32) {
    %c0_i32 = arith.constant 0 : i32
    %c0_i32_0 = arith.constant 0 : i32
    return %arg0, %c0_i32 : i32, i32
  }
  func.func @transform_1(%arg0: i32) -> (i32, i32) {
    %c0_i32 = arith.constant 0 : i32
    %c0_i32_0 = arith.constant 0 : i32
    %c0_i32_1 = arith.constant 0 : i32
    return %c0_i32, %c0_i32_0 : i32, i32
  }
  func.func @transform_2(%arg0: i32) -> (i32, i32) {
    %c0_i32 = arith.constant 0 : i32
    %c0_i32_0 = arith.constant 0 : i32
    %c0_i32_1 = arith.constant 0 : i32
    return %c0_i32, %c0_i32_0 : i32, i32
  }
  func.func @transform_3(%arg0: i32) -> (i32, i32) {
    %c0_i32 = arith.constant 0 : i32
    %c0_i32_0 = arith.constant 0 : i32
    return %arg0, %c0_i32 : i32, i32
  }
}

</mosaic_0001>

<llo_original>
// kernel: tpu_custom_call.1
$region0: #{tpu_custom_call.1}
  #allocation0 [shape = 'u32[]', space=smem, size = 0x4, offset = 0x4, fixed_abs, tag = 'smem constant byte address 0x4 - core index']
  #allocation1 [shape = 'u32[72,128]{1,0:T(1,128)}', space=vmem, size = 0x9000, scoped, tag = 'internal scratch']
  %s0 = inlined_call_operand.hbm [shape: f32[16,256], index: 0, kind: input, shape index: {}]
  %s1 = inlined_call_operand.hbm [shape: f32[1,256], index: 1, kind: input, shape index: {}]
  %s2 = inlined_call_operand.hbm [shape: f32[1,256], index: 2, kind: input, shape index: {}]
  %s3 = inlined_call_operand.hbm [shape: f32[16,256], index: 3, kind: output, shape index: {}]
  %s4 = sld [smem:[#allocation0]]
  $region57: #{tpu_custom_call.1} parent=0
    _
  %s6 = ssub.s32 1, %s4
  %s7 = scalar_select 0, %s6, %s4
  $region1: #{tpu_custom_call.1} parent=0
    #allocation2 [shape = 'u8[16384]{0}', space=vmem, size = 0x4000, scoped, tag = 'input window, operand 0']
    #allocation3 [shape = 's32[2]{0}', space=sflag, size = 0x8, scoped, tag = 'scoped memory for tpu_custom_call.1']
    #allocation4 [shape = 's32[2]{0}', space=sflag, size = 0x8, scoped, tag = 'scoped memory for tpu_custom_call.1']
    #allocation5 [shape = 'u8[1024]{0}', space=vmem, size = 0x400, scoped, tag = 'input window, operand 1, single buffered']
    #allocation6 [shape = 's32[1]{0}', space=sflag, size = 0x4, scoped, tag = 'scoped memory for tpu_custom_call.1']
    #allocation7 [shape = 'u8[1024]{0}', space=vmem, size = 0x400, scoped, tag = 'input window, operand 2, single buffered']
    #allocation8 [shape = 'u8[16384]{0}', space=vmem, size = 0x4000, scoped, tag = 'output window, operand 0']
    %8 = vsyncpa [#allocation3], 0
    %s9 = scalar_lea.sflag [#allocation3], 1
    %10 = vsyncpa %s9, 0
    %11 = vsyncpa [#allocation6], 0
    %12 = vsyncpa [#allocation4], 0
    %s13 = scalar_lea.sflag [#allocation4], 1
    %14 = vsyncpa %s13, 0
    loop: start=0, step=1, limit=4
    $region2: #{tpu_custom_call.1} parent=1 // loop_pre_header
      _
    $region3: #{tpu_custom_call.1} parent=1 // loop_header
      %s16 = sphi 0, %s20
      %p17 = scmp.ge.s32.totalorder %s16, 4
      %s26 = sphi 0, %s28
      %s29 = sphi 0, %s26
      %s30 = sphi 0, %s29
      %s46 = sphi 0, %s30
      %s50 = sphi 0, %s50
      %s52 = sphi 0, %s50
      %s53 = sphi 0, %s52
      %s67 = sphi 0, %s53
      %s71 = sphi 0, %s71
      %s73 = sphi 0, %s71
      %s74 = sphi 0, %s73
      %s88 = sphi 0, %s74
      %s94 = sphi 0, %s96
      %s97 = sphi 0, %s94
      %s98 = sphi 0, %s97
      %s114 = sphi 0, %s98
    $region4: #{tpu_custom_call.1} parent=1 // loop_header_branch
      %19 = sbr.rel (%p17) target = $region8
    $region5: #{tpu_custom_call.1} parent=1 // loop_body
      %s21 = ssub.s32 %s16, 1
      %s22 = ssub.s32 %s16, 2
      %s23 = sadd.s32 %s16, 1
      %s24 = ssub.s32 %s16, %s23
      %p25 = scmp.eq.s32.totalorder %s24, 0
      %s27 = sadd.s32 %s26, 1
      %s28 = scalar_select %p25, %s26, %s27
      %p31 = pneg %p25
      %p32 = scmp.eq.s32.totalorder %s16, 1
      %p33 = por %p31, %p32
      %p34 = scmp.ne.s32.totalorder %s26, %s29
      %p35 = scmp.eq.s32.totalorder %s16, 0
      %p36 = por %p34, %p35
      %p37 = scmp.ne.s32.totalorder %s26, %s29
      %p38 = scmp.eq.s32.totalorder %s21, 1
      %p39 = por %p37, %p38
      %p40 = scmp.ne.s32.totalorder %s29, %s30
      %p41 = scmp.eq.s32.totalorder %s21, 0
      %p42 = por %p40, %p41
      %p43 = scmp.ne.s32.totalorder %s29, %s30
      %p44 = scmp.eq.s32.totalorder %s22, 1
      %p45 = por %p43, %p44
      %p47 = scmp.ne.s32.totalorder %s30, %s46
      %p48 = scmp.eq.s32.totalorder %s22, 0
      %p49 = por %p47, %p48
      %s51 = sadd.s32 %s50, 1
      %p54 = scmp.eq.s32.totalorder %s16, 1
      %p55 = scmp.ne.s32.totalorder %s50, %s52
      %p56 = scmp.eq.s32.totalorder %s16, 0
      %p57 = por %p55, %p56
      %p58 = scmp.ne.s32.totalorder %s50, %s52
      %p59 = scmp.eq.s32.totalorder %s21, 1
      %p60 = por %p58, %p59
      %p61 = scmp.ne.s32.totalorder %s52, %s53
      %p62 = scmp.eq.s32.totalorder %s21, 0
      %p63 = por %p61, %p62
      %p64 = scmp.ne.s32.totalorder %s52, %s53
      %p65 = scmp.eq.s32.totalorder %s22, 1
      %p66 = por %p64, %p65
      %p68 = scmp.ne.s32.totalorder %s53, %s67
      %p69 = scmp.eq.s32.totalorder %s22, 0
      %p70 = por %p68, %p69
      %s72 = sadd.s32 %s71, 1
      %p75 = scmp.eq.s32.totalorder %s16, 1
      %p76 = scmp.ne.s32.totalorder %s71, %s73
      %p77 = scmp.eq.s32.totalorder %s16, 0
      %p78 = por %p76, %p77
      %p79 = scmp.ne.s32.totalorder %s71, %s73
      %p80 = scmp.eq.s32.totalorder %s21, 1
      %p81 = por %p79, %p80
      %p82 = scmp.ne.s32.totalorder %s73, %s74
      %p83 = scmp.eq.s32.totalorder %s21, 0
      %p84 = por %p82, %p83
      %p85 = scmp.ne.s32.totalorder %s73, %s74
      %p86 = scmp.eq.s32.totalorder %s22, 1
      %p87 = por %p85, %p86
      %p89 = scmp.ne.s32.totalorder %s74, %s88
      %p90 = scmp.eq.s32.totalorder %s22, 0
      %p91 = por %p89, %p90
      %s92 = ssub.s32 %s16, %s23
      %p93 = scmp.eq.s32.totalorder %s92, 0
      %s95 = sadd.s32 %s94, 1
      %s96 = scalar_select %p93, %s94, %s95
      %p99 = pneg %p93
      %p100 = scmp.eq.s32.totalorder %s16, 1
      %p101 = por %p99, %p100
      %p102 = scmp.ne.s32.totalorder %s94, %s97
      %p103 = scmp.eq.s32.totalorder %s16, 0
      %p104 = por %p102, %p103
      %p105 = scmp.ne.s32.totalorder %s94, %s97
      %p106 = scmp.eq.s32.totalorder %s21, 1
      %p107 = por %p105, %p106
      %p108 = scmp.ne.s32.totalorder %s97, %s98
      %p109 = scmp.eq.s32.totalorder %s21, 0
      %p110 = por %p108, %p109
      %p111 = scmp.ne.s32.totalorder %s97, %s98
      %p112 = scmp.eq.s32.totalorder %s22, 1
      %p113 = por %p111, %p112
      %p115 = scmp.ne.s32.totalorder %s98, %s114
      %p116 = scmp.eq.s32.totalorder %s22, 0
      %p117 = por %p115, %p116
      %p118 = scmp.le.s32.totalorder 1, %s16
      %p119 = scmp.lt.s32.totalorder %s16, 3
      %p120 = pnand %p118, %p119
      %p121 = pneg %p120
      // Predicated region
      $region9: #{tpu_custom_call.1} parent=5 // pred_check
        _
      $region10: #{tpu_custom_call.1} parent=5 // pred_check_branch
        %123 = sbr.rel (%p120) target = $region12
      $region11: #{tpu_custom_call.1} parent=5 // pred_region
        %s124 = ssub.s32 %s16, 1
        // Predicated region
        $region13: #{tpu_custom_call.1} parent=11 // pred_check
          %p125 = pneg %p63
        $region14: #{tpu_custom_call.1} parent=11 // pred_check_branch
          %127 = sbr.rel (%p125) target = $region16
        $region15: #{tpu_custom_call.1} parent=11 // pred_region
          %129 = vsyncadd [#allocation6], 0
          %s131 = sshll.u32 %s1, 4
          %s132 = int_to_ptr.hbm [resolvable:$true] %s131
          %s133 = sshll.u32 [#allocation5], 4
          %s134 = int_to_ptr.vmem [resolvable:$true] %s133
          %136 = dma.hbm_to_vmem [thread:$0]  %s132, 32, %s134, [#allocation6]
        $region16: #{tpu_custom_call.1} parent=11 // pred_fallthru
          _
        // Predicated region
        $region17: #{tpu_custom_call.1} parent=11 // pred_check
          %p137 = pneg %p84
        $region18: #{tpu_custom_call.1} parent=11 // pred_check_branch
          %139 = sbr.rel (%p137) target = $region20
        $region19: #{tpu_custom_call.1} parent=11 // pred_region
          %141 = vsyncadd [#allocation6], 0
          %s143 = sshll.u32 %s2, 4
          %s144 = int_to_ptr.hbm [resolvable:$true] %s143
          %s145 = sshll.u32 [#allocation7], 4
          %s146 = int_to_ptr.vmem [resolvable:$true] %s145
          %148 = dma.hbm_to_vmem [thread:$0]  %s144, 32, %s146, [#allocation6]
        $region20: #{tpu_custom_call.1} parent=11 // pred_fallthru
          _
      $region12: #{tpu_custom_call.1} parent=5 // pred_fallthru
        _
      %p149 = scmp.lt.s32.totalorder %s16, 2
      // Predicated region
      $region21: #{tpu_custom_call.1} parent=5 // pred_check
        %p150 = pneg %p149
      $region22: #{tpu_custom_call.1} parent=5 // pred_check_branch
        %152 = sbr.rel (%p150) target = $region24
      $region23: #{tpu_custom_call.1} parent=5 // pred_region
        // Predicated region
        $region25: #{tpu_custom_call.1} parent=23 // pred_check
          %p153 = pneg %p36
        $region26: #{tpu_custom_call.1} parent=23 // pred_check_branch
          %155 = sbr.rel (%p153) target = $region28
        $region27: #{tpu_custom_call.1} parent=23 // pred_region
          %s156 = sand.u32 %s26, 1
          %s157 = scalar_lea.sflag [#allocation3], %s156
          %s158 = sand.u32 %s26, 1
          %s159 = smul.addr %s158, 16
          %s160 = scalar_lea.vmem [#allocation2], %s159
          %162 = vsyncadd %s157, 0
          %s163 = smul.addr %s16, 2
          %s164 = smul.addr %s163, 8
          %s165 = scalar_lea.hbm %s0, %s164
          %s167 = sshll.u32 %s165, 4
          %s168 = int_to_ptr.hbm [resolvable:$true] %s167
          %s169 = sshll.u32 %s160, 4
          %s170 = int_to_ptr.vmem [resolvable:$true] %s169
          %172 = dma.hbm_to_vmem [thread:$0]  %s168, 256, %s170, %s157
        $region28: #{tpu_custom_call.1} parent=23 // pred_fallthru
          _
      $region24: #{tpu_custom_call.1} parent=5 // pred_fallthru
        _
      %p173 = scmp.le.s32.totalorder 1, %s16
      %p174 = scmp.lt.s32.totalorder %s16, 3
      %p175 = pnand %p173, %p174
      %p176 = pneg %p175
      // Predicated region
      $region29: #{tpu_custom_call.1} parent=5 // pred_check
        _
      $region30: #{tpu_custom_call.1} parent=5 // pred_check_branch
        %178 = sbr.rel (%p175) target = $region32
      $region31: #{tpu_custom_call.1} parent=5 // pred_region
        %s179 = ssub.s32 %s16, 1
        %s180 = sand.u32 %s29, 1
        %s181 = scalar_lea.sflag [#allocation3], %s180
        %s182 = sand.u32 %s29, 1
        %s183 = smul.addr %s182, 16
        %s184 = scalar_lea.vmem [#allocation2], %s183
        // Predicated region
        $region33: #{tpu_custom_call.1} parent=31 // pred_check
          %p185 = pneg %p42
        $region34: #{tpu_custom_call.1} parent=31 // pred_check_branch
          %187 = sbr.rel (%p185) target = $region36
        $region35: #{tpu_custom_call.1} parent=31 // pred_region
          %189 = dma.done %s181, 256
        $region36: #{tpu_custom_call.1} parent=31 // pred_fallthru
          _
        // Predicated region
        $region37: #{tpu_custom_call.1} parent=31 // pred_check
          %p190 = pneg %p63
        $region38: #{tpu_custom_call.1} parent=31 // pred_check_branch
          %192 = sbr.rel (%p190) target = $region40
        $region39: #{tpu_custom_call.1} parent=31 // pred_region
          %194 = dma.done [#allocation6], 32
        $region40: #{tpu_custom_call.1} parent=31 // pred_fallthru
          _
        // Predicated region
        $region41: #{tpu_custom_call.1} parent=31 // pred_check
          %p195 = pneg %p84
        $region42: #{tpu_custom_call.1} parent=31 // pred_check_branch
          %197 = sbr.rel (%p195) target = $region44
        $region43: #{tpu_custom_call.1} parent=31 // pred_region
          %199 = dma.done [#allocation6], 32
        $region44: #{tpu_custom_call.1} parent=31 // pred_fallthru
          _
        %s200 = sand.u32 %s29, 1
        %s201 = scalar_lea.sflag [#allocation3], %s200
        %s202 = sand.u32 %s29, 1
        %s203 = smul.addr %s202, 16
        %s204 = scalar_lea.vmem [#allocation2], %s203
        %p205 = pneg %p42
        %p206 = pneg %p39
        %p207 = pneg %p63
        %p208 = pneg %p60
        %p209 = pneg %p84
        %p210 = pneg %p81
        %p211 = pneg %p110
        %p212 = pneg %p107
        %s213 = sand.u32 %s97, 1
        %s214 = scalar_lea.sflag [#allocation4], %s213
        %s215 = sand.u32 %s97, 1
        %s216 = smul.addr %s215, 16
        %s217 = scalar_lea.vmem [#allocation8], %s216
        %v218 = vld [vmem:[%s184] sm:$0xff]
        %v219 = vld [vmem:[%s184 + $0x8] sm:$0xff]
        %v220 = vadd.f32 %v218, %v219
        %221 = vadd.xlane.f32.xlu0 %v220
        %v222 = vpop.xlane.xlu0 %221
        %v223 = vmul.f32 %v222, 0.00390625
        %v224 = vmul.f32 %v218, %v218
        %v225 = vmul.f32 %v219, %v219
        %v226 = vadd.f32 %v224, %v225
        %227 = vadd.xlane.f32.xlu0 %v226
        %v228 = vpop.xlane.xlu0 %227
        %v229 = vmul.f32 %v228, 0.00390625
        %v230 = vmul.f32 %v223, %v223
        %v231 = vsub.f32 %v229, %v230
        %v232 = vmax.f32 %v231, 0.0
        %v233 = vadd.f32 %v232, 1e-05
        %v234 = vrsqrt.pop %v233
        %v235 = vmul.f32 %v234, %v233
        %v236 = vmul.f32 %v235, %v234
        %v237 = vmul.f32 0.5, %v236
        %v238 = vsub.f32 1.5, %v237
        %v239 = vmul.f32 %v234, %v238
        %vm240 = vweird.f32 %v233
        %vm241 = vweird.f32 %v234
        %vm242 = vmor %vm240, %vm241
        %v243 = vsel %vm242, %v234, %v239
        %v244 = vld [vmem:[#allocation5] sm:$0x3]
        %v246 = vperm.slane %v244, 0
        %v247 = vperm.slane %v244, 1
        %v250 = vmul.f32 %v243, %v246
        %v251 = vmul.f32 %v243, %v247
        %v252 = vld [vmem:[#allocation7] sm:$0x3]
        %v253 = vmul.f32 %v223, %v250
        %v254 = vmul.f32 %v223, %v251
        %v256 = vperm.slane %v252, 0
        %v257 = vperm.slane %v252, 1
        %v260 = vsub.f32 %v256, %v253
        %v261 = vsub.f32 %v257, %v254
        %v262 = vmul.f32 %v218, %v250
        %v263 = vmul.f32 %v219, %v251
        %v264 = vadd.f32 %v262, %v260
        %v265 = vadd.f32 %v263, %v261
        %266 = vst [vmem:[%s217] sm:$0xff] %v264
        %267 = vst [vmem:[%s217 + $0x8] sm:$0xff] %v265
        %s268 = sand.u32 %s97, 1
        %s269 = scalar_lea.sflag [#allocation4], %s268
        %s270 = sand.u32 %s97, 1
        %s271 = smul.addr %s270, 16
        %s272 = scalar_lea.vmem [#allocation8], %s271
        // Predicated region
        $region45: #{tpu_custom_call.1} parent=31 // pred_check
          %p273 = pneg %p107
        $region46: #{tpu_custom_call.1} parent=31 // pred_check_branch
          %275 = sbr.rel (%p273) target = $region48
        $region47: #{tpu_custom_call.1} parent=31 // pred_region
          %277 = vsyncadd %s269, 0
          %s278 = smul.addr %s21, 2
          %s279 = smul.addr %s278, 8
          %s280 = scalar_lea.hbm %s3, %s279
          %s282 = sshll.u32 %s272, 4
          %s283 = int_to_ptr.vmem [resolvable:$true] %s282
          %s284 = sshll.u32 %s280, 4
          %s285 = int_to_ptr.hbm [resolvable:$true] %s284
          %287 = dma.vmem_to_hbm [thread:$0]  %s283, 256, %s285, %s269
        $region48: #{tpu_custom_call.1} parent=31 // pred_fallthru
          _
      $region32: #{tpu_custom_call.1} parent=5 // pred_fallthru
        _
      %p288 = scmp.le.s32.totalorder 2, %s16
      // Predicated region
      $region49: #{tpu_custom_call.1} parent=5 // pred_check
        %p289 = pneg %p288
      $region50: #{tpu_custom_call.1} parent=5 // pred_check_branch
        %291 = sbr.rel (%p289) target = $region52
      $region51: #{tpu_custom_call.1} parent=5 // pred_region
        %s292 = ssub.s32 %s16, 2
        // Predicated region
        $region53: #{tpu_custom_call.1} parent=51 // pred_check
          %p293 = pneg %p113
        $region54: #{tpu_custom_call.1} parent=51 // pred_check_branch
          %295 = sbr.rel (%p293) target = $region56
        $region55: #{tpu_custom_call.1} parent=51 // pred_region
          %s296 = sand.u32 %s98, 1
          %s297 = scalar_lea.sflag [#allocation4], %s296
          %s298 = sand.u32 %s98, 1
          %s299 = smul.addr %s298, 16
          %s300 = scalar_lea.vmem [#allocation8], %s299
          %302 = dma.done %s297, 256
        $region56: #{tpu_custom_call.1} parent=51 // pred_fallthru
          _
      $region52: #{tpu_custom_call.1} parent=5 // pred_fallthru
        _
    $region6: #{tpu_custom_call.1} parent=1 // loop_footer
      %s20 = sadd.s32 1, %s16
    $region7: #{tpu_custom_call.1} parent=1 // loop_footer_branch
      %15 = sbr.rel target = $region3
    $region8: #{tpu_custom_call.1} parent=1 // loop_exit
      _
    %303 = vsyncpa [#allocation3], 1
    %s304 = scalar_lea.sflag [#allocation3], 1
    %305 = vsyncpa %s304, 1
    %306 = vsyncpa [#allocation6], 1
    %307 = vsyncpa [#allocation4], 1
    %s308 = scalar_lea.sflag [#allocation4], 1
    %309 = vsyncpa %s308, 1

</llo_original>
